<compile_context>
chip_gen: v7x
topology: tpu7x:2x2x1
jax: 0.10.0
libtpu: 0.0.40
codegen_flags: <defaults>
</compile_context>

<pallas_src>
import functools
import math

import jax
import jax.numpy as jnp
from jax.experimental import pallas as pl
from jax.experimental.pallas import tpu as pltpu


def _hswish(x):
    # h_swish(x) = x * relu6(x + 3) / 6
    return x * jnp.clip(x + 3.0, 0.0, 6.0) * (1.0 / 6.0)


# --------------------------------------------------------------------------
# Fused kernel: one grid step processes `bt` batch elements as a channels-major
# (channels, bt*L) slab; everything stays in VMEM.
# --------------------------------------------------------------------------
def _agca_kernel(*refs, head, d, L, bt, fast, mxu_dtype):
    f32 = jnp.float32
    if fast:
        x_ref, wf_ref, sh_ref, wv_ref, wp_ref, bp_ref, o_ref = refs
    else:
        x_ref, wf_ref, sh_ref, wqkv_ref, lng_ref, lnb_ref, wp_ref, bp_ref, o_ref = refs

    hd = head * d
    xblk = x_ref[0].astype(mxu_dtype)                           # (C, bt*L)

    # channel_fuse: Conv1d(k=1) with the inference-BN scale pre-folded into the
    # weight (done in the wrapper); add shift column; h_swish.  VPU math in f32.
    y = jnp.dot(wf_ref[...].astype(mxu_dtype), xblk,
                preferred_element_type=f32)                     # (4C, bt*L)
    y = _hswish(y + sh_ref[...])

    wp = wp_ref[...].astype(mxu_dtype)                          # (exp, hd)
    parts = []

    if fast:
        # head == 1 and L == d: softmax over a 1x1 score == 1  =>  att == v, so q/k
        # (and their LayerNorms) are never computed.  wv_ref is the v-slice of the
        # qkv weight only -> 3x less MXU work than the merged qkv matmul.
        v = jnp.dot(wv_ref[...].astype(mxu_dtype), y.astype(mxu_dtype),
                    preferred_element_type=f32)                 # (d, bt*L)
        for b in range(bt):
            vb = v[:, b * L:(b + 1) * L]                        # (d, L), static slice
            # reference: att.view(B,1,d,L).permute(0,3,2,1) + proj + final NCL permute
            #   ==  out[o, i] = sum_j wp[o, j] * vb[i, j]   (transposed-RHS dot)
            parts.append(
                jax.lax.dot_general(wp, vb.astype(mxu_dtype),
                                    (((1,), (1,)), ((), ())),
                                    preferred_element_type=f32))     # (exp, L)
    else:
        # General path (head > 1 or L != d); only traced when that config is used.
        # TODO(synk): if this path is ever hot, replace the transpose+reshape pairs
        #             with dot_general dimension numbers / pltpu.einshape.
        gam = lng_ref[...]                                      # (d, 1)
        bet = lnb_ref[...]                                      # (d, 1)
        wqkv = wqkv_ref[...].astype(mxu_dtype)                  # (3*hd, 4C)
        E = L * d

        def _ln(t):                                             # per-head LN over d rows
            outs = []
            for h in range(head):
                th = t[h * d:(h + 1) * d, :]
                mu = jnp.mean(th, axis=0, keepdims=True)
                var = jnp.mean((th - mu) ** 2, axis=0, keepdims=True)
                outs.append((th - mu) * jax.lax.rsqrt(var + 1e-5) * gam + bet)
            return outs[0] if head == 1 else jnp.concatenate(outs, axis=0)

        for b in range(bt):
            yb = y[:, b * L:(b + 1) * L].astype(mxu_dtype)      # (4C, L)
            qkv = jnp.dot(wqkv, yb, preferred_element_type=f32)  # (3*hd, L)
            q = _ln(qkv[0:hd, :])
            k = _ln(qkv[hd:2 * hd, :])
            v = qkv[2 * hd:3 * hd, :]
            qn = jnp.transpose(q).reshape(head, E)              # torch reshape(B, head, -1)
            kn = jnp.transpose(k).reshape(head, E)
            vn = jnp.transpose(v).reshape(head, E)
            s = jax.lax.dot_general(qn, kn, (((1,), (1,)), ((), ())),
                                    preferred_element_type=f32) * (1.0 / math.sqrt(E))
            s = s - jnp.max(s, axis=-1, keepdims=True)
            p = jnp.exp(s)
            p = p / jnp.sum(p, axis=-1, keepdims=True)
            att = jnp.dot(p, vn, preferred_element_type=f32)     # (head, E)
            a = jnp.transpose(att.reshape(head, d, L), (2, 1, 0)).reshape(L, hd)
            parts.append(
                jax.lax.dot_general(wp, a.astype(mxu_dtype),
                                    (((1,), (1,)), ((), ())),
                                    preferred_element_type=f32))     # (exp, L)

    out = parts[0] if bt == 1 else jnp.concatenate(parts, axis=1)   # (exp, bt*L)
    # proj Dropout(0.0) is identity; add bias; h_swish; ONE lane-dense store.
    o_ref[0] = _hswish(out + bp_ref[...]).astype(o_ref.dtype)


# --------------------------------------------------------------------------
# Wrapper
# --------------------------------------------------------------------------
def _pick_block_b(B, L, lane_target=512):
    """Largest divisor of B whose slab width bt*L stays <= lane_target, while
    keeping >= 2 grid steps whenever B >= 2 (v7x has 2 TensorCores)."""
    best = 1
    for t in range(1, B + 1):
        if B % t:
            continue
        if t > 1 and t * L > lane_target:
            continue
        if B >= 2 and B // t < 2:
            continue
        best = t
    return best


def agca_forward(x, params, head=1, d=16, mxu_dtype=jnp.float32, block_b=None):
    """Fused agca forward.  x: (B, exp_size, L) NCL.  Returns (B, exp_size, L).

    mxu_dtype: dtype fed to the MXU dots.  jnp.float32 at toy sizes; pass
    jnp.bfloat16 on v6e/v7x at production C/L (elementwise math stays f32).
    """
    B, C, L = x.shape
    exp = C
    hd = head * d
    f32 = jnp.float32
    fast = (head == 1 and L == d)

    bt = block_b if block_b is not None else _pick_block_b(B, L)
    assert B % bt == 0, (B, bt)
    G = B // bt
    cols = bt * L

    # ---- one-time weight prep (runs once under jit) -------------------------
    # Fold conv bias + inference BatchNorm: scale into the conv weight, shift column.
    scale = params["bn_gamma"] / jnp.sqrt(params["bn_var"] + 1e-5)
    wf = (scale[:, None] * params["fuse_w"]).astype(f32)               # (4C, C)
    sh = (params["bn_beta"] + scale * (params["fuse_b"] - params["bn_mean"]))
    sh = sh.reshape(4 * C, 1).astype(f32)
    wp = params["proj_w"].astype(f32)                                  # (exp, hd)
    bp = params["proj_b"].reshape(exp, 1).astype(f32)

    # Channels-major slab: x (B,C,L) -> (G, C, bt*L); identity when bt == 1.
    # (No wrapper-side astype of x: the kernel casts the loaded block.)
    xs = jnp.transpose(x.reshape(G, bt, C, L), (0, 2, 1, 3)).reshape(G, C, cols)

    def _wspec(shape):                      # grid-invariant weight: constant index_map
        n = len(shape)                      # -> stays resident, no per-step re-DMA
        return pl.BlockSpec(shape, lambda g, _n=n: (0,) * _n)

    if fast:
        wv = params["qkv_w"][2 * hd:3 * hd, :].astype(f32)             # v slice only
        operands = (xs, wf, sh, wv, wp, bp)
        w_specs = [_wspec((4 * C, C)), _wspec((4 * C, 1)), _wspec((hd, 4 * C)),
                   _wspec((exp, hd)), _wspec((exp, 1))]
    else:
        wqkv = params["qkv_w"].astype(f32)                             # (3*hd, 4C)
        lng = params["ln_gamma"].reshape(d, 1).astype(f32)
        lnb = params["ln_beta"].reshape(d, 1).astype(f32)
        operands = (xs, wf, sh, wqkv, lng, lnb, wp, bp)
        w_specs = [_wspec((4 * C, C)), _wspec((4 * C, 1)), _wspec((3 * hd, 4 * C)),
                   _wspec((d, 1)), _wspec((d, 1)),
                   _wspec((exp, hd)), _wspec((exp, 1))]

    # Explicit VMEM budget: double-buffered x/out blocks + weights + intermediates,
    # with slack.  Keeps larger bt/L choices from silently hitting the 32 MiB scoped
    # default; capped at v7x's 64 MiB physical VMEM.
    w_bytes = sum(int(o.size) * 4 for o in operands[1:])
    blk_bytes = (C + exp) * cols * 4
    inter_bytes = (4 * C + 3 * hd) * cols * 4
    vmem_limit = int(min(64 << 20,
                         max(16 << 20, 4 * (2 * blk_bytes + 2 * w_bytes + inter_bytes))))

    kernel = functools.partial(_agca_kernel, head=head, d=d, L=L, bt=bt,
                               fast=fast, mxu_dtype=mxu_dtype)

    out = pl.pallas_call(
        kernel,
        grid=(G,),
        in_specs=[pl.BlockSpec((1, C, cols), lambda g: (g, 0, 0))] + w_specs,
        out_specs=pl.BlockSpec((1, exp, cols), lambda g: (g, 0, 0)),
        out_shape=jax.ShapeDtypeStruct((G, exp, cols), x.dtype),
        compiler_params=pltpu.CompilerParams(
            dimension_semantics=("parallel",),
            vmem_limit_bytes=vmem_limit),
    )(*operands)

    # (G, exp, bt*L) -> (B, exp, L) NCL; identity when bt == 1.
    return jnp.transpose(out.reshape(G, exp, bt, L), (0, 2, 1, 3)).reshape(B, exp, L)


# --------------------------------------------------------------------------
# Pure-JAX reference (same math as the PyTorch module) for a correctness check.
# --------------------------------------------------------------------------
def agca_reference(x, params, head=1, d=16):
    B, C, L = x.shape
    xt = jnp.transpose(x, (0, 2, 1))
    scale = params["bn_gamma"] / jnp.sqrt(params["bn_var"] + 1e-5)
    shift = params["bn_beta"] + scale * (params["fuse_b"] - params["bn_mean"])
    y = jnp.einsum("blc,oc->blo", xt, params["fuse_w"], precision="highest")
    y = _hswish(y * scale + shift)                                   # (B, L, 4C)
    qkv = jnp.einsum("blc,oc->blo", y, params["qkv_w"], precision="highest")
    qkv = qkv.reshape(B, L, 3, head, d).transpose(2, 0, 1, 3, 4)
    q, k, v = qkv[0], qkv[1], qkv[2]

    def ln(t):
        mu = jnp.mean(t, -1, keepdims=True)
        var = jnp.mean((t - mu) ** 2, -1, keepdims=True)
        return (t - mu) / jnp.sqrt(var + 1e-5) * params["ln_gamma"] + params["ln_beta"]

    q, k = ln(q), ln(k)
    q = q.reshape(B, head, -1)
    k = k.reshape(B, head, -1)
    v = v.reshape(B, head, -1)
    E = q.shape[-1]
    s = jnp.einsum("bhe,bge->bhg", q, k, precision="highest") / math.sqrt(E)
    p = jax.nn.softmax(s, axis=-1)
    att = jnp.einsum("bhg,bge->bhe", p, v, precision="highest")
    out = att.reshape(B, head, d, L).transpose(0, 3, 2, 1).reshape(B, L, d * head)
    out = jnp.einsum("blk,ok->blo", out, params["proj_w"], precision="highest") + params["proj_b"]
    out = _hswish(out)
    return jnp.transpose(out, (0, 2, 1))


if __name__ == "__main__":
    exp_size = 4      # channels
    head = 1
    d = 16
    B, L = 2, 16

    key = jax.random.PRNGKey(0)
    ks = jax.random.split(key, 10)
    params = {
        # channel_fuse: Conv1d(exp -> 4*exp, k=1) weight/bias (kernel dim squeezed)
        "fuse_w": 0.3 * jax.random.normal(ks[0], (4 * exp_size, exp_size), jnp.float32),
        "fuse_b": 0.1 * jax.random.normal(ks[1], (4 * exp_size,), jnp.float32),
        # BatchNorm1d(4*exp) in inference mode
        "bn_gamma": 1.0 + 0.1 * jax.random.normal(ks[2], (4 * exp_size,), jnp.float32),
        "bn_beta": 0.1 * jax.random.normal(ks[3], (4 * exp_size,), jnp.float32),
        "bn_mean": jnp.zeros((4 * exp_size,), jnp.float32),
        "bn_var": jnp.ones((4 * exp_size,), jnp.float32),
        # qkv Linear(4*exp -> 3*head*d, bias=False)
        "qkv_w": 0.2 * jax.random.normal(ks[4], (3 * head * d, 4 * exp_size), jnp.float32),
        # LayerNorm(d)
        "ln_gamma": 1.0 + 0.1 * jax.random.normal(ks[5], (d,), jnp.float32),
        "ln_beta": 0.1 * jax.random.normal(ks[6], (d,), jnp.float32),
        # proj Linear(d*head -> exp)
        "proj_w": 0.2 * jax.random.normal(ks[7], (exp_size, d * head), jnp.float32),
        "proj_b": 0.1 * jax.random.normal(ks[8], (exp_size,), jnp.float32),
    }

    x = jax.random.normal(ks[9], (B, exp_size, L), jnp.float32)      # NCL input

    out = agca_forward(x, params, head=head, d=d)
    out = jax.block_until_ready(out)

    ref = agca_reference(x, params, head=head, d=d)
    err = float(jnp.max(jnp.abs(out - ref)))
    assert out.shape == (B, exp_size, L), out.shape
    # f32 path is typically ~1e-6; loose bound kept to stay robust to the MXU's
    # f32 matmul pass configuration across TPU generations.
    assert err < 1e-2, f"max abs err {err}"
    print("KERNEL_OK")
</pallas_src>

<mosaic_0001>
module attributes {stable_mosaic.version = 11 : i64} {
  func.func @_agca_kernel(%arg0: i32, %arg1: memref<1x4x16xf32, #tpu.memory_space<vmem>>, %arg2: memref<16x4xf32, #tpu.memory_space<vmem>>, %arg3: memref<16x1xf32, #tpu.memory_space<vmem>>, %arg4: memref<16x16xf32, #tpu.memory_space<vmem>>, %arg5: memref<4x16xf32, #tpu.memory_space<vmem>>, %arg6: memref<4x1xf32, #tpu.memory_space<vmem>>, %arg7: memref<1x4x16xf32, #tpu.memory_space<vmem>>) attributes {dimension_semantics = [#tpu.dimension_semantics<parallel>], iteration_bounds = array<i64: 2>, scalar_prefetch = 0 : i64, scratch_operands = 0 : i64, tpu.core_type = #tpu.core_type<tc>, window_params = [{transform_indices = @transform_0, window_bounds = array<i64: 1, 4, 16>}, {pipeline_mode = #tpu.pipeline_mode<synchronous>, transform_indices = @transform_1, window_bounds = array<i64: 16, 4>}, {pipeline_mode = #tpu.pipeline_mode<synchronous>, transform_indices = @transform_2, window_bounds = array<i64: 16, 1>}, {pipeline_mode = #tpu.pipeline_mode<synchronous>, transform_indices = @transform_3, window_bounds = array<i64: 16, 16>}, {pipeline_mode = #tpu.pipeline_mode<synchronous>, transform_indices = @transform_4, window_bounds = array<i64: 4, 16>}, {pipeline_mode = #tpu.pipeline_mode<synchronous>, transform_indices = @transform_5, window_bounds = array<i64: 4, 1>}, {transform_indices = @transform_6, window_bounds = array<i64: 1, 4, 16>}]} {
    %c0 = arith.constant 0 : index
    %c0_0 = arith.constant 0 : index
    %c0_1 = arith.constant 0 : index
    %0 = vector.load %arg1[%c0, %c0_0, %c0_1] : memref<1x4x16xf32, #tpu.memory_space<vmem>>, vector<1x4x16xf32>
    %1 = vector.shape_cast %0 : vector<1x4x16xf32> to vector<4x16xf32>
    %c0_2 = arith.constant 0 : index
    %c0_3 = arith.constant 0 : index
    %2 = vector.load %arg2[%c0_2, %c0_3] : memref<16x4xf32, #tpu.memory_space<vmem>>, vector<16x4xf32>
    %cst = arith.constant dense<0.000000e+00> : vector<16x16xf32>
    %3 = tpu.matmul %2, %1, %cst {dimension_numbers = #tpu.dot_dimension_numbers<[1], [0], [0], [1], [0, 0, 1, 1], [], []>} : vector<16x4xf32>, vector<4x16xf32>, vector<16x16xf32> -> vector<16x16xf32>
    %c0_4 = arith.constant 0 : index
    %c0_5 = arith.constant 0 : index
    %4 = vector.load %arg3[%c0_4, %c0_5] : memref<16x1xf32, #tpu.memory_space<vmem>>, vector<16x1xf32>
    %5 = vector.broadcast %4 : vector<16x1xf32> to vector<16x16xf32>
    %6 = arith.addf %3, %5 : vector<16x16xf32>
    %cst_6 = arith.constant 3.000000e+00 : f32
    %7 = vector.broadcast %cst_6 : f32 to vector<16x16xf32>
    %8 = arith.addf %6, %7 : vector<16x16xf32>
    %cst_7 = arith.constant 0.000000e+00 : f32
    %cst_8 = arith.constant 6.000000e+00 : f32
    %9 = vector.broadcast %cst_7 : f32 to vector<16x16xf32>
    %10 = arith.maximumf %9, %8 : vector<16x16xf32>
    %11 = vector.broadcast %cst_8 : f32 to vector<16x16xf32>
    %12 = arith.minimumf %11, %10 : vector<16x16xf32>
    %13 = arith.mulf %6, %12 : vector<16x16xf32>
    %cst_9 = arith.constant 0.166666672 : f32
    %14 = vector.broadcast %cst_9 : f32 to vector<16x16xf32>
    %15 = arith.mulf %13, %14 : vector<16x16xf32>
    %c0_10 = arith.constant 0 : index
    %c0_11 = arith.constant 0 : index
    %16 = vector.load %arg5[%c0_10, %c0_11] : memref<4x16xf32, #tpu.memory_space<vmem>>, vector<4x16xf32>
    %c0_12 = arith.constant 0 : index
    %c0_13 = arith.constant 0 : index
    %17 = vector.load %arg4[%c0_12, %c0_13] : memref<16x16xf32, #tpu.memory_space<vmem>>, vector<16x16xf32>
    %cst_14 = arith.constant dense<0.000000e+00> : vector<16x16xf32>
    %18 = tpu.matmul %17, %15, %cst_14 {dimension_numbers = #tpu.dot_dimension_numbers<[1], [0], [0], [1], [0, 0, 1, 1], [], []>} : vector<16x16xf32>, vector<16x16xf32>, vector<16x16xf32> -> vector<16x16xf32>
    %cst_15 = arith.constant dense<0.000000e+00> : vector<4x16xf32>
    %19 = tpu.matmul %16, %18, %cst_15 {dimension_numbers = #tpu.dot_dimension_numbers<[1], [1], [0], [0], [0, 0, 1, 0], [], []>} : vector<4x16xf32>, vector<16x16xf32>, vector<4x16xf32> -> vector<4x16xf32>
    %c0_16 = arith.constant 0 : index
    %c0_17 = arith.constant 0 : index
    %20 = vector.load %arg6[%c0_16, %c0_17] : memref<4x1xf32, #tpu.memory_space<vmem>>, vector<4x1xf32>
    %21 = vector.broadcast %20 : vector<4x1xf32> to vector<4x16xf32>
    %22 = arith.addf %19, %21 : vector<4x16xf32>
    %cst_18 = arith.constant 3.000000e+00 : f32
    %23 = vector.broadcast %cst_18 : f32 to vector<4x16xf32>
    %24 = arith.addf %22, %23 : vector<4x16xf32>
    %cst_19 = arith.constant 0.000000e+00 : f32
    %cst_20 = arith.constant 6.000000e+00 : f32
    %25 = vector.broadcast %cst_19 : f32 to vector<4x16xf32>
    %26 = arith.maximumf %25, %24 : vector<4x16xf32>
    %27 = vector.broadcast %cst_20 : f32 to vector<4x16xf32>
    %28 = arith.minimumf %27, %26 : vector<4x16xf32>
    %29 = arith.mulf %22, %28 : vector<4x16xf32>
    %cst_21 = arith.constant 0.166666672 : f32
    %30 = vector.broadcast %cst_21 : f32 to vector<4x16xf32>
    %31 = arith.mulf %29, %30 : vector<4x16xf32>
    %c0_22 = arith.constant 0 : index
    %c0_23 = arith.constant 0 : index
    %c0_24 = arith.constant 0 : index
    %32 = vector.load %arg7[%c0_22, %c0_23, %c0_24] : memref<1x4x16xf32, #tpu.memory_space<vmem>>, vector<1x4x16xf32>
    %33 = vector.shape_cast %32 : vector<1x4x16xf32> to vector<4x16xf32>
    %34 = vector.shape_cast %31 : vector<4x16xf32> to vector<1x4x16xf32>
    tpu.vector_store %arg7[%c0_22, %c0_23, %c0_24], %34 {strides = array<i32>} : memref<1x4x16xf32, #tpu.memory_space<vmem>>, vector<1x4x16xf32>,
    return
  }
  func.func @transform_0(%arg0: i32) -> (i32, i32, i32) {
    %c0_i32 = arith.constant 0 : i32
    %c0_i32_0 = arith.constant 0 : i32
    %c0_i32_1 = arith.constant 0 : i32
    return %arg0, %c0_i32, %c0_i32_0 : i32, i32, i32
  }
  func.func @transform_1(%arg0: i32) -> (i32, i32) {
    %c0_i32 = arith.constant 0 : i32
    %c0_i32_0 = arith.constant 0 : i32
    %c0_i32_1 = arith.constant 0 : i32
    return %c0_i32, %c0_i32_0 : i32, i32
  }
  func.func @transform_2(%arg0: i32) -> (i32, i32) {
    %c0_i32 = arith.constant 0 : i32
    %c0_i32_0 = arith.constant 0 : i32
    %c0_i32_1 = arith.constant 0 : i32
    return %c0_i32, %c0_i32_0 : i32, i32
  }
  func.func @transform_3(%arg0: i32) -> (i32, i32) {
    %c0_i32 = arith.constant 0 : i32
    %c0_i32_0 = arith.constant 0 : i32
    %c0_i32_1 = arith.constant 0 : i32
    return %c0_i32, %c0_i32_0 : i32, i32
  }
  func.func @transform_4(%arg0: i32) -> (i32, i32) {
    %c0_i32 = arith.constant 0 : i32
    %c0_i32_0 = arith.constant 0 : i32
    %c0_i32_1 = arith.constant 0 : i32
    return %c0_i32, %c0_i32_0 : i32, i32
  }
  func.func @transform_5(%arg0: i32) -> (i32, i32) {
    %c0_i32 = arith.constant 0 : i32
    %c0_i32_0 = arith.constant 0 : i32
    %c0_i32_1 = arith.constant 0 : i32
    return %c0_i32, %c0_i32_0 : i32, i32
  }
  func.func @transform_6(%arg0: i32) -> (i32, i32, i32) {
    %c0_i32 = arith.constant 0 : i32
    %c0_i32_0 = arith.constant 0 : i32
    %c0_i32_1 = arith.constant 0 : i32
    return %arg0, %c0_i32, %c0_i32_0 : i32, i32, i32
  }
}

</mosaic_0001>

<llo_original>
// kernel: tpu_custom_call.1
$region0: #{tpu_custom_call.1}
  #allocation0 [shape = 'u32[]', space=smem, size = 0x4, offset = 0x4, fixed_abs, tag = 'smem constant byte address 0x4 - core index']
  #allocation1 [shape = 'u32[144,128]{1,0:T(1,128)}', space=vmem, size = 0x12000, scoped, tag = 'internal scratch']
  %s0 = inlined_call_operand.vmem [shape: f32[2,4,16], index: 0, kind: input, shape index: {}]
  %s1 = inlined_call_operand.vmem [shape: f32[16,4], index: 1, kind: input, shape index: {}]
  %s2 = inlined_call_operand.vmem [shape: f32[16,1], index: 2, kind: input, shape index: {}]
  %s3 = inlined_call_operand.vmem [shape: f32[16,16], index: 3, kind: input, shape index: {}]
  %s4 = inlined_call_operand.vmem [shape: f32[4,16], index: 4, kind: input, shape index: {}]
  %s5 = inlined_call_operand.vmem [shape: f32[4,1], index: 5, kind: input, shape index: {}]
  %s6 = inlined_call_operand.hbm [shape: f32[2,4,16], index: 6, kind: output, shape index: {}]
  %s7 = sld [smem:[#allocation0]]
  $region57: #{tpu_custom_call.1} parent=0
    _
  %s9 = ssub.s32 1, %s7
  %s10 = scalar_select 0, %s9, %s7
  $region1: #{tpu_custom_call.1} parent=0
    #allocation2 [shape = 'u8[4096]{0}', space=vmem, size = 0x1000, scoped, tag = 'output window, operand 0']
    #allocation3 [shape = 's32[2]{0}', space=sflag, size = 0x8, scoped, tag = 'scoped memory for tpu_custom_call.1']
    %11 = vsyncpa [#allocation3], 0
    %s12 = scalar_lea.sflag [#allocation3], 1
    %13 = vsyncpa %s12, 0
    loop: start=0, step=1, limit=4
    $region2: #{tpu_custom_call.1} parent=1 // loop_pre_header
      _
    $region3: #{tpu_custom_call.1} parent=1 // loop_header
      %s15 = sphi 0, %s19
      %p16 = scmp.ge.s32.totalorder %s15, 4
      %s25 = sphi 0, %s27
      %s28 = sphi 0, %s25
      %s29 = sphi 0, %s28
      %s45 = sphi 0, %s29
      %s49 = sphi 0, %s49
      %s51 = sphi 0, %s49
      %s52 = sphi 0, %s51
      %s66 = sphi 0, %s52
      %s70 = sphi 0, %s70
      %s72 = sphi 0, %s70
      %s73 = sphi 0, %s72
      %s87 = sphi 0, %s73
      %s91 = sphi 0, %s91
      %s93 = sphi 0, %s91
      %s94 = sphi 0, %s93
      %s108 = sphi 0, %s94
      %s112 = sphi 0, %s112
      %s114 = sphi 0, %s112
      %s115 = sphi 0, %s114
      %s129 = sphi 0, %s115
      %s133 = sphi 0, %s133
      %s135 = sphi 0, %s133
      %s136 = sphi 0, %s135
      %s150 = sphi 0, %s136
      %s156 = sphi 0, %s158
      %s159 = sphi 0, %s156
      %s160 = sphi 0, %s159
      %s176 = sphi 0, %s160
    $region4: #{tpu_custom_call.1} parent=1 // loop_header_branch
      %18 = sbr.rel (%p16) target = $region8
    $region5: #{tpu_custom_call.1} parent=1 // loop_body
      %s20 = ssub.s32 %s15, 1
      %s21 = ssub.s32 %s15, 2
      %s22 = sadd.s32 %s15, 1
      %s23 = ssub.s32 %s15, %s22
      %p24 = scmp.eq.s32.totalorder %s23, 0
      %s26 = sadd.s32 %s25, 1
      %s27 = scalar_select %p24, %s25, %s26
      %p30 = pneg %p24
      %p31 = scmp.eq.s32.totalorder %s15, 1
      %p32 = por %p30, %p31
      %p33 = scmp.ne.s32.totalorder %s25, %s28
      %p34 = scmp.eq.s32.totalorder %s15, 0
      %p35 = por %p33, %p34
      %p36 = scmp.ne.s32.totalorder %s25, %s28
      %p37 = scmp.eq.s32.totalorder %s20, 1
      %p38 = por %p36, %p37
      %p39 = scmp.ne.s32.totalorder %s28, %s29
      %p40 = scmp.eq.s32.totalorder %s20, 0
      %p41 = por %p39, %p40
      %p42 = scmp.ne.s32.totalorder %s28, %s29
      %p43 = scmp.eq.s32.totalorder %s21, 1
      %p44 = por %p42, %p43
      %p46 = scmp.ne.s32.totalorder %s29, %s45
      %p47 = scmp.eq.s32.totalorder %s21, 0
      %p48 = por %p46, %p47
      %s50 = sadd.s32 %s49, 1
      %p53 = scmp.eq.s32.totalorder %s15, 1
      %p54 = scmp.ne.s32.totalorder %s49, %s51
      %p55 = scmp.eq.s32.totalorder %s15, 0
      %p56 = por %p54, %p55
      %p57 = scmp.ne.s32.totalorder %s49, %s51
      %p58 = scmp.eq.s32.totalorder %s20, 1
      %p59 = por %p57, %p58
      %p60 = scmp.ne.s32.totalorder %s51, %s52
      %p61 = scmp.eq.s32.totalorder %s20, 0
      %p62 = por %p60, %p61
      %p63 = scmp.ne.s32.totalorder %s51, %s52
      %p64 = scmp.eq.s32.totalorder %s21, 1
      %p65 = por %p63, %p64
      %p67 = scmp.ne.s32.totalorder %s52, %s66
      %p68 = scmp.eq.s32.totalorder %s21, 0
      %p69 = por %p67, %p68
      %s71 = sadd.s32 %s70, 1
      %p74 = scmp.eq.s32.totalorder %s15, 1
      %p75 = scmp.ne.s32.totalorder %s70, %s72
      %p76 = scmp.eq.s32.totalorder %s15, 0
      %p77 = por %p75, %p76
      %p78 = scmp.ne.s32.totalorder %s70, %s72
      %p79 = scmp.eq.s32.totalorder %s20, 1
      %p80 = por %p78, %p79
      %p81 = scmp.ne.s32.totalorder %s72, %s73
      %p82 = scmp.eq.s32.totalorder %s20, 0
      %p83 = por %p81, %p82
      %p84 = scmp.ne.s32.totalorder %s72, %s73
      %p85 = scmp.eq.s32.totalorder %s21, 1
      %p86 = por %p84, %p85
      %p88 = scmp.ne.s32.totalorder %s73, %s87
      %p89 = scmp.eq.s32.totalorder %s21, 0
      %p90 = por %p88, %p89
      %s92 = sadd.s32 %s91, 1
      %p95 = scmp.eq.s32.totalorder %s15, 1
      %p96 = scmp.ne.s32.totalorder %s91, %s93
      %p97 = scmp.eq.s32.totalorder %s15, 0
      %p98 = por %p96, %p97
      %p99 = scmp.ne.s32.totalorder %s91, %s93
      %p100 = scmp.eq.s32.totalorder %s20, 1
      %p101 = por %p99, %p100
      %p102 = scmp.ne.s32.totalorder %s93, %s94
      %p103 = scmp.eq.s32.totalorder %s20, 0
      %p104 = por %p102, %p103
      %p105 = scmp.ne.s32.totalorder %s93, %s94
      %p106 = scmp.eq.s32.totalorder %s21, 1
      %p107 = por %p105, %p106
      %p109 = scmp.ne.s32.totalorder %s94, %s108
      %p110 = scmp.eq.s32.totalorder %s21, 0
      %p111 = por %p109, %p110
      %s113 = sadd.s32 %s112, 1
      %p116 = scmp.eq.s32.totalorder %s15, 1
      %p117 = scmp.ne.s32.totalorder %s112, %s114
      %p118 = scmp.eq.s32.totalorder %s15, 0
      %p119 = por %p117, %p118
      %p120 = scmp.ne.s32.totalorder %s112, %s114
      %p121 = scmp.eq.s32.totalorder %s20, 1
      %p122 = por %p120, %p121
      %p123 = scmp.ne.s32.totalorder %s114, %s115
      %p124 = scmp.eq.s32.totalorder %s20, 0
      %p125 = por %p123, %p124
      %p126 = scmp.ne.s32.totalorder %s114, %s115
      %p127 = scmp.eq.s32.totalorder %s21, 1
      %p128 = por %p126, %p127
      %p130 = scmp.ne.s32.totalorder %s115, %s129
      %p131 = scmp.eq.s32.totalorder %s21, 0
      %p132 = por %p130, %p131
      %s134 = sadd.s32 %s133, 1
      %p137 = scmp.eq.s32.totalorder %s15, 1
      %p138 = scmp.ne.s32.totalorder %s133, %s135
      %p139 = scmp.eq.s32.totalorder %s15, 0
      %p140 = por %p138, %p139
      %p141 = scmp.ne.s32.totalorder %s133, %s135
      %p142 = scmp.eq.s32.totalorder %s20, 1
      %p143 = por %p141, %p142
      %p144 = scmp.ne.s32.totalorder %s135, %s136
      %p145 = scmp.eq.s32.totalorder %s20, 0
      %p146 = por %p144, %p145
      %p147 = scmp.ne.s32.totalorder %s135, %s136
      %p148 = scmp.eq.s32.totalorder %s21, 1
      %p149 = por %p147, %p148
      %p151 = scmp.ne.s32.totalorder %s136, %s150
      %p152 = scmp.eq.s32.totalorder %s21, 0
      %p153 = por %p151, %p152
      %s154 = ssub.s32 %s15, %s22
      %p155 = scmp.eq.s32.totalorder %s154, 0
      %s157 = sadd.s32 %s156, 1
      %s158 = scalar_select %p155, %s156, %s157
      %p161 = pneg %p155
      %p162 = scmp.eq.s32.totalorder %s15, 1
      %p163 = por %p161, %p162
      %p164 = scmp.ne.s32.totalorder %s156, %s159
      %p165 = scmp.eq.s32.totalorder %s15, 0
      %p166 = por %p164, %p165
      %p167 = scmp.ne.s32.totalorder %s156, %s159
      %p168 = scmp.eq.s32.totalorder %s20, 1
      %p169 = por %p167, %p168
      %p170 = scmp.ne.s32.totalorder %s159, %s160
      %p171 = scmp.eq.s32.totalorder %s20, 0
      %p172 = por %p170, %p171
      %p173 = scmp.ne.s32.totalorder %s159, %s160
      %p174 = scmp.eq.s32.totalorder %s21, 1
      %p175 = por %p173, %p174
      %p177 = scmp.ne.s32.totalorder %s160, %s176
      %p178 = scmp.eq.s32.totalorder %s21, 0
      %p179 = por %p177, %p178
      %p180 = scmp.le.s32.totalorder 1, %s15
      %p181 = scmp.lt.s32.totalorder %s15, 3
      %p182 = pnand %p180, %p181
      %p183 = pneg %p182
      // Predicated region
      $region9: #{tpu_custom_call.1} parent=5 // pred_check
        _
      $region10: #{tpu_custom_call.1} parent=5 // pred_check_branch
        %185 = sbr.rel (%p182) target = $region12
      $region11: #{tpu_custom_call.1} parent=5 // pred_region
        %s186 = ssub.s32 %s15, 1
        // Predicated region
        $region13: #{tpu_custom_call.1} parent=11 // pred_check
          %p187 = pneg %p62
        $region14: #{tpu_custom_call.1} parent=11 // pred_check_branch
          %189 = sbr.rel (%p187) target = $region16
        $region15: #{tpu_custom_call.1} parent=11 // pred_region
          _
        $region16: #{tpu_custom_call.1} parent=11 // pred_fallthru
          _
        // Predicated region
        $region17: #{tpu_custom_call.1} parent=11 // pred_check
          %p190 = pneg %p83
        $region18: #{tpu_custom_call.1} parent=11 // pred_check_branch
          %192 = sbr.rel (%p190) target = $region20
        $region19: #{tpu_custom_call.1} parent=11 // pred_region
          _
        $region20: #{tpu_custom_call.1} parent=11 // pred_fallthru
          _
        // Predicated region
        $region21: #{tpu_custom_call.1} parent=11 // pred_check
          %p193 = pneg %p104
        $region22: #{tpu_custom_call.1} parent=11 // pred_check_branch
          %195 = sbr.rel (%p193) target = $region24
        $region23: #{tpu_custom_call.1} parent=11 // pred_region
          _
        $region24: #{tpu_custom_call.1} parent=11 // pred_fallthru
          _
        // Predicated region
        $region25: #{tpu_custom_call.1} parent=11 // pred_check
          %p196 = pneg %p125
        $region26: #{tpu_custom_call.1} parent=11 // pred_check_branch
          %198 = sbr.rel (%p196) target = $region28
        $region27: #{tpu_custom_call.1} parent=11 // pred_region
          _
        $region28: #{tpu_custom_call.1} parent=11 // pred_fallthru
          _
        // Predicated region
        $region29: #{tpu_custom_call.1} parent=11 // pred_check
          %p199 = pneg %p146
        $region30: #{tpu_custom_call.1} parent=11 // pred_check_branch
          %201 = sbr.rel (%p199) target = $region32
        $region31: #{tpu_custom_call.1} parent=11 // pred_region
          _
        $region32: #{tpu_custom_call.1} parent=11 // pred_fallthru
          _
      $region12: #{tpu_custom_call.1} parent=5 // pred_fallthru
        _
      %p202 = scmp.lt.s32.totalorder %s15, 2
      // Predicated region
      $region33: #{tpu_custom_call.1} parent=5 // pred_check
        %p203 = pneg %p202
      $region34: #{tpu_custom_call.1} parent=5 // pred_check_branch
        %205 = sbr.rel (%p203) target = $region36
      $region35: #{tpu_custom_call.1} parent=5 // pred_region
        // Predicated region
        $region37: #{tpu_custom_call.1} parent=35 // pred_check
          %p206 = pneg %p35
        $region38: #{tpu_custom_call.1} parent=35 // pred_check_branch
          %208 = sbr.rel (%p206) target = $region40
        $region39: #{tpu_custom_call.1} parent=35 // pred_region
          %p209 = scmp.lt.s32.totalorder %s15, 1
          %s210 = scalar_select %p209, %s15, 1
          %s211 = smul.addr %s210, 4
          %s212 = scalar_lea.vmem %s0, %s211
        $region40: #{tpu_custom_call.1} parent=35 // pred_fallthru
          _
      $region36: #{tpu_custom_call.1} parent=5 // pred_fallthru
        _
      %p213 = scmp.le.s32.totalorder 1, %s15
      %p214 = scmp.lt.s32.totalorder %s15, 3
      %p215 = pnand %p213, %p214
      %p216 = pneg %p215
      // Predicated region
      $region41: #{tpu_custom_call.1} parent=5 // pred_check
        _
      $region42: #{tpu_custom_call.1} parent=5 // pred_check_branch
        %218 = sbr.rel (%p215) target = $region44
      $region43: #{tpu_custom_call.1} parent=5 // pred_region
        %s219 = ssub.s32 %s15, 1
        %p220 = scmp.lt.s32.totalorder %s20, 1
        %s221 = scalar_select %p220, %s20, 1
        %s222 = smul.addr %s221, 4
        %s223 = scalar_lea.vmem %s0, %s222
        %p224 = pneg %p41
        %p225 = pneg %p38
        %p226 = pneg %p62
        %p227 = pneg %p59
        %p228 = pneg %p83
        %p229 = pneg %p80
        %p230 = pneg %p104
        %p231 = pneg %p101
        %p232 = pneg %p125
        %p233 = pneg %p122
        %p234 = pneg %p146
        %p235 = pneg %p143
        %p236 = pneg %p172
        %p237 = pneg %p169
        %s238 = sand.u32 %s159, 1
        %s239 = scalar_lea.sflag [#allocation3], %s238
        %s240 = sand.u32 %s159, 1
        %s241 = smul.addr %s240, 4
        %s242 = scalar_lea.vmem [#allocation2], %s241
        %p243 = scmp.lt.s32.totalorder %s20, 1
        %s244 = scalar_select %p243, %s20, 1
        %s245 = smul.addr %s244, 4
        %s246 = scalar_lea.vmem %s0, %s245
        %v247 = vld [vmem:[%s246] sm:$0xf]
        %v248 = vld [vmem:[%s1] sm:$0xff]
        %v249 = vld [vmem:[%s1 + $0x8] sm:$0xff]
        %v250 = vld [vmem:[%s2] sm:$0xff]
        %v251 = vld [vmem:[%s2 + $0x8] sm:$0xff]
        %253 = vset.pattern.permute.xlu0 0
        %254 = vperm.xlu0 %253, %v250
        %v255 = vpop.permute.xlu0 %254
        %258 = vset.pattern.permute.xlu0 0
        %259 = vperm.xlu0 %258, %v251
        %v260 = vpop.permute.xlu0 %259
        %vm262 = vcmask 31744
        %v264 = vsel %vm262, %v248, 0
        %v267 = vsel %vm262, %v249, 0
        %vm269 = vcmask 1043456
        %v271 = vsel %vm269, %v247, 0
        %273 = vmatprep.subr.mxu0 0.0
        %274 = vmatpush1.msra.mxu0 %v271
        %275 = vmatprep.subr.mxu0 0.0
        %276 = vmatpush1.msra.mxu0 0.0
        %277 = vmatprep.subr.mxu0 0.0
        %278 = vmatpush1.msra.mxu0 0.0
        %279 = vmatprep.subr.mxu0 0.0
        %280 = vmatpush1.msra.mxu0 0.0
        %281 = vmatprep.subr.mxu0 0.0
        %282 = vmatpush1.msra.mxu0 0.0
        %283 = vmatprep.subr.mxu0 0.0
        %284 = vmatpush1.msra.mxu0 0.0
        %285 = vmatprep.subr.mxu0 0.0
        %286 = vmatpush1.msra.mxu0 0.0
        %287 = vmatprep.subr.mxu0 0.0
        %288 = vmatpush1.msra.mxu0 0.0
        %289 = vmatprep.subr.mxu0 0.0
        %290 = vmatpush1.msra.mxu0 0.0
        %291 = vmatprep.subr.mxu0 0.0
        %292 = vmatpush1.msra.mxu0 0.0
        %293 = vmatprep.subr.mxu0 0.0
        %294 = vmatpush1.msra.mxu0 0.0
        %295 = vmatprep.subr.mxu0 0.0
        %296 = vmatpush1.msra.mxu0 0.0
        %297 = vmatprep.subr.mxu0 0.0
        %298 = vmatpush1.msra.mxu0 0.0
        %299 = vmatprep.subr.mxu0 0.0
        %300 = vmatpush1.msra.mxu0 0.0
        %301 = vmatprep.subr.mxu0 0.0
        %302 = vmatpush1.msra.mxu0 0.0
        %303 = vmatprep.subr.mxu0 0.0
        %304 = vmatpush1.msra.mxu0 0.0
        %305 = vmatprep.subr.mxu0 0.0
        %306 = vmatpush1.msra.mxu0 0.0
        %307 = vmatprep.subr.mxu0 0.0
        %308 = vmatpush1.msra.mxu0 0.0
        %309 = vmatprep.subr.mxu0 0.0
        %310 = vmatpush1.msra.mxu0 0.0
        %311 = vmatprep.subr.mxu0 0.0
        %312 = vmatpush1.msra.mxu0 0.0
        %313 = vmatprep.subr.mxu0 0.0
        %314 = vmatpush1.msra.mxu0 0.0
        %315 = vmatprep.subr.mxu0 0.0
        %316 = vmatpush1.msra.mxu0 0.0
        %317 = vmatprep.subr.mxu0 0.0
        %318 = vmatpush1.msra.mxu0 0.0
        %319 = vmatprep.subr.mxu0 0.0
        %320 = vmatpush1.msra.mxu0 0.0
        %321 = vmatprep.subr.mxu0 0.0
        %322 = vmatpush1.msra.mxu0 0.0
        %323 = vmatprep.subr.mxu0 0.0
        %324 = vmatpush1.msra.mxu0 0.0
        %325 = vmatprep.subr.mxu0 0.0
        %326 = vmatpush1.msra.mxu0 0.0
        %327 = vmatprep.subr.mxu0 0.0
        %328 = vmatpush1.msra.mxu0 0.0
        %329 = vmatprep.subr.mxu0 0.0
        %330 = vmatpush1.msra.mxu0 0.0
        %331 = vmatprep.subr.mxu0 0.0
        %332 = vmatpush1.msra.mxu0 0.0
        %333 = vmatprep.subr.mxu0 0.0
        %334 = vmatpush1.msra.mxu0 0.0
        %335 = vmatprep.subr.mxu0 0.0
        %336 = vmatpush1.msra.mxu0 0.0
        %337 = vmatprep.mubr.f32.mxu0 0.0
        %338 = vmatmul.mubr.f32.gmra.mrb[0].mxu0 %v264
        %v339 = vpop.f32.mrb[0].mxu0
        %v340 = vadd.f32 %v255, %v339
        %v341 = vpop.f32.mrb[0].mxu0
        %342 = vmatprep.mubr.f32.mxu0 0.0
        %343 = vmatmul.mubr.f32.gmra.mrb[0].mxu0 %v267
        %v344 = vpop.f32.mrb[0].mxu0
        %v345 = vadd.f32 %v260, %v344
        %v346 = vpop.f32.mrb[0].mxu0
        %347 = vdwg.mxu0
        %v348 = vadd.f32 %v340, 3.0
        %v349 = vadd.f32 %v345, 3.0
        %v350 = vmax.f32 %v348, 0.0
        %v351 = vmax.f32 %v349, 0.0
        %v352 = vmin.f32 %v350, 6.0
        %v353 = vmin.f32 %v351, 6.0
        %v354 = vmul.f32 %v340, %v352
        %v355 = vmul.f32 %v345, %v353
        %v356 = vmul.f32 %v354, 0.16666667
        %v357 = vmul.f32 %v355, 0.16666667
        %v358 = vld [vmem:[%s4] sm:$0xf]
        %v359 = vld [vmem:[%s3] sm:$0xff]
        %v360 = vld [vmem:[%s3 + $0x8] sm:$0xff]
        %vm361 = vcmask 130048
        %v363 = vsel %vm361, %v359, 0
        %v366 = vsel %vm361, %v360, 0
        %368 = vmatprep.subr.mxu0 0.0
        %369 = vmatpush1.msra.mxu0 %v356
        %370 = vmatprep.subr.mxu0 0.0
        %371 = vmatpush1.msra.mxu0 %v357
        %372 = vmatprep.subr.mxu0 0.0
        %373 = vmatpush1.msra.mxu0 0.0
        %374 = vmatprep.subr.mxu0 0.0
        %375 = vmatpush1.msra.mxu0 0.0
        %376 = vmatprep.subr.mxu0 0.0
        %377 = vmatpush1.msra.mxu0 0.0
        %378 = vmatprep.subr.mxu0 0.0
        %379 = vmatpush1.msra.mxu0 0.0
        %380 = vmatprep.subr.mxu0 0.0
        %381 = vmatpush1.msra.mxu0 0.0
        %382 = vmatprep.subr.mxu0 0.0
        %383 = vmatpush1.msra.mxu0 0.0
        %384 = vmatprep.subr.mxu0 0.0
        %385 = vmatpush1.msra.mxu0 0.0
        %386 = vmatprep.subr.mxu0 0.0
        %387 = vmatpush1.msra.mxu0 0.0
        %388 = vmatprep.subr.mxu0 0.0
        %389 = vmatpush1.msra.mxu0 0.0
        %390 = vmatprep.subr.mxu0 0.0
        %391 = vmatpush1.msra.mxu0 0.0
        %392 = vmatprep.subr.mxu0 0.0
        %393 = vmatpush1.msra.mxu0 0.0
        %394 = vmatprep.subr.mxu0 0.0
        %395 = vmatpush1.msra.mxu0 0.0
        %396 = vmatprep.subr.mxu0 0.0
        %397 = vmatpush1.msra.mxu0 0.0
        %398 = vmatprep.subr.mxu0 0.0
        %399 = vmatpush1.msra.mxu0 0.0
        %400 = vmatprep.subr.mxu0 0.0
        %401 = vmatpush1.msra.mxu0 0.0
        %402 = vmatprep.subr.mxu0 0.0
        %403 = vmatpush1.msra.mxu0 0.0
        %404 = vmatprep.subr.mxu0 0.0
        %405 = vmatpush1.msra.mxu0 0.0
        %406 = vmatprep.subr.mxu0 0.0
        %407 = vmatpush1.msra.mxu0 0.0
        %408 = vmatprep.subr.mxu0 0.0
        %409 = vmatpush1.msra.mxu0 0.0
        %410 = vmatprep.subr.mxu0 0.0
        %411 = vmatpush1.msra.mxu0 0.0
        %412 = vmatprep.subr.mxu0 0.0
        %413 = vmatpush1.msra.mxu0 0.0
        %414 = vmatprep.subr.mxu0 0.0
        %415 = vmatpush1.msra.mxu0 0.0
        %416 = vmatprep.subr.mxu0 0.0
        %417 = vmatpush1.msra.mxu0 0.0
        %418 = vmatprep.subr.mxu0 0.0
        %419 = vmatpush1.msra.mxu0 0.0
        %420 = vmatprep.subr.mxu0 0.0
        %421 = vmatpush1.msra.mxu0 0.0
        %422 = vmatprep.subr.mxu0 0.0
        %423 = vmatpush1.msra.mxu0 0.0
        %424 = vmatprep.subr.mxu0 0.0
        %425 = vmatpush1.msra.mxu0 0.0
        %426 = vmatprep.subr.mxu0 0.0
        %427 = vmatpush1.msra.mxu0 0.0
        %428 = vmatprep.subr.mxu0 0.0
        %429 = vmatpush1.msra.mxu0 0.0
        %430 = vmatprep.subr.mxu0 0.0
        %431 = vmatpush1.msra.mxu0 0.0
        %432 = vmatprep.mubr.f32.mxu0 0.0
        %433 = vmatmul.mubr.f32.gmra.mrb[0].mxu0 %v363
        %v434 = vpop.f32.mrb[0].mxu0
        %v435 = vadd.f32 0.0, %v434
        %v436 = vpop.f32.mrb[0].mxu0
        %437 = vmatprep.mubr.f32.mxu0 0.0
        %438 = vmatmul.mubr.f32.gmra.mrb[0].mxu0 %v366
        %v439 = vpop.f32.mrb[0].mxu0
        %v440 = vadd.f32 0.0, %v439
        %v441 = vpop.f32.mrb[0].mxu0
        %442 = vdwg.mxu0
        %v443 = vld [vmem:[%s5] sm:$0xf]
        %445 = vset.pattern.permute.xlu0 0
        %446 = vperm.xlu0 %445, %v443
        %v447 = vpop.permute.xlu0 %446
        %v450 = vsel %vm361, %v358, 0
        %v453 = vsel %vm361, %v435, 0
        %v456 = vsel %vm361, %v440, 0
        %458 = vmatprep.subr.mxu0 0.0
        %459 = vmatpush1.xpose.msra.mxu0 %v453
        %460 = vmatprep.subr.mxu0 0.0
        %461 = vmatpush1.xpose.msra.mxu0 %v456
        %462 = vmatprep.subr.mxu0 0.0
        %463 = vmatpush1.xpose.msra.mxu0 0.0
        %464 = vmatprep.subr.mxu0 0.0
        %465 = vmatpush1.xpose.msra.mxu0 0.0
        %466 = vmatprep.subr.mxu0 0.0
        %467 = vmatpush1.xpose.msra.mxu0 0.0
        %468 = vmatprep.subr.mxu0 0.0
        %469 = vmatpush1.xpose.msra.mxu0 0.0
        %470 = vmatprep.subr.mxu0 0.0
        %471 = vmatpush1.xpose.msra.mxu0 0.0
        %472 = vmatprep.subr.mxu0 0.0
        %473 = vmatpush1.xpose.msra.mxu0 0.0
        %474 = vmatprep.subr.mxu0 0.0
        %475 = vmatpush1.xpose.msra.mxu0 0.0
        %476 = vmatprep.subr.mxu0 0.0
        %477 = vmatpush1.xpose.msra.mxu0 0.0
        %478 = vmatprep.subr.mxu0 0.0
        %479 = vmatpush1.xpose.msra.mxu0 0.0
        %480 = vmatprep.subr.mxu0 0.0
        %481 = vmatpush1.xpose.msra.mxu0 0.0
        %482 = vmatprep.subr.mxu0 0.0
        %483 = vmatpush1.xpose.msra.mxu0 0.0
        %484 = vmatprep.subr.mxu0 0.0
        %485 = vmatpush1.xpose.msra.mxu0 0.0
        %486 = vmatprep.subr.mxu0 0.0
        %487 = vmatpush1.xpose.msra.mxu0 0.0
        %488 = vmatprep.subr.mxu0 0.0
        %489 = vmatpush1.xpose.msra.mxu0 0.0
        %490 = vmatprep.subr.mxu0 0.0
        %491 = vmatpush1.xpose.msra.mxu0 0.0
        %492 = vmatprep.subr.mxu0 0.0
        %493 = vmatpush1.xpose.msra.mxu0 0.0
        %494 = vmatprep.subr.mxu0 0.0
        %495 = vmatpush1.xpose.msra.mxu0 0.0
        %496 = vmatprep.subr.mxu0 0.0
        %497 = vmatpush1.xpose.msra.mxu0 0.0
        %498 = vmatprep.subr.mxu0 0.0
        %499 = vmatpush1.xpose.msra.mxu0 0.0
        %500 = vmatprep.subr.mxu0 0.0
        %501 = vmatpush1.xpose.msra.mxu0 0.0
        %502 = vmatprep.subr.mxu0 0.0
        %503 = vmatpush1.xpose.msra.mxu0 0.0
        %504 = vmatprep.subr.mxu0 0.0
        %505 = vmatpush1.xpose.msra.mxu0 0.0
        %506 = vmatprep.subr.mxu0 0.0
        %507 = vmatpush1.xpose.msra.mxu0 0.0
        %508 = vmatprep.subr.mxu0 0.0
        %509 = vmatpush1.xpose.msra.mxu0 0.0
        %510 = vmatprep.subr.mxu0 0.0
        %511 = vmatpush1.xpose.msra.mxu0 0.0
        %512 = vmatprep.subr.mxu0 0.0
        %513 = vmatpush1.xpose.msra.mxu0 0.0
        %514 = vmatprep.subr.mxu0 0.0
        %515 = vmatpush1.xpose.msra.mxu0 0.0
        %516 = vmatprep.subr.mxu0 0.0
        %517 = vmatpush1.xpose.msra.mxu0 0.0
        %518 = vmatprep.subr.mxu0 0.0
        %519 = vmatpush1.xpose.msra.mxu0 0.0
        %520 = vmatprep.subr.mxu0 0.0
        %521 = vmatpush1.xpose.msra.mxu0 0.0
        %522 = vmatprep.mubr.f32.mxu0 0.0
        %523 = vmatmul.mubr.f32.gmra.mrb[0].mxu0 %v450
        %v524 = vpop.f32.mrb[0].mxu0
        %v525 = vadd.f32 %v447, %v524
        %v526 = vpop.f32.mrb[0].mxu0
        %527 = vdwg.mxu0
        %v528 = vadd.f32 %v525, 3.0
        %v529 = vmax.f32 %v528, 0.0
        %v530 = vmin.f32 %v529, 6.0
        %v531 = vmul.f32 %v525, %v530
        %v532 = vmul.f32 %v531, 0.16666667
        %vm533 = vcmask 125952
        %534 = vst.msk [vmem:[%s242] sm:$0xf] %vm533, %v532
        %s535 = sand.u32 %s159, 1
        %s536 = scalar_lea.sflag [#allocation3], %s535
        %s537 = sand.u32 %s159, 1
        %s538 = smul.addr %s537, 4
        %s539 = scalar_lea.vmem [#allocation2], %s538
        // Predicated region
        $region45: #{tpu_custom_call.1} parent=43 // pred_check
          %p540 = pneg %p169
        $region46: #{tpu_custom_call.1} parent=43 // pred_check_branch
          %542 = sbr.rel (%p540) target = $region48
        $region47: #{tpu_custom_call.1} parent=43 // pred_region
          %s544 = ssub.s32 64, 64
          %545 = vsyncadd %s536, %s544
          %s546 = smul.addr %s20, 64
          %s547 = scalar_lea.hbm %s6, %s546
          %s549 = sshll.u32 %s539, 4
          %s550 = int_to_ptr.vmem [resolvable:$true] %s549
          %552 = dma.vmem_to_hbm [thread:$0]  %s550, 64, %s547, %s536
        $region48: #{tpu_custom_call.1} parent=43 // pred_fallthru
          _
      $region44: #{tpu_custom_call.1} parent=5 // pred_fallthru
        _
      %p553 = scmp.le.s32.totalorder 2, %s15
      // Predicated region
      $region49: #{tpu_custom_call.1} parent=5 // pred_check
        %p554 = pneg %p553
      $region50: #{tpu_custom_call.1} parent=5 // pred_check_branch
        %556 = sbr.rel (%p554) target = $region52
      $region51: #{tpu_custom_call.1} parent=5 // pred_region
        %s557 = ssub.s32 %s15, 2
        // Predicated region
        $region53: #{tpu_custom_call.1} parent=51 // pred_check
          %p558 = pneg %p175
        $region54: #{tpu_custom_call.1} parent=51 // pred_check_branch
          %560 = sbr.rel (%p558) target = $region56
        $region55: #{tpu_custom_call.1} parent=51 // pred_region
          %s561 = sand.u32 %s160, 1
          %s562 = scalar_lea.sflag [#allocation3], %s561
          %s563 = sand.u32 %s160, 1
          %s564 = smul.addr %s563, 4
          %s565 = scalar_lea.vmem [#allocation2], %s564
          %566 = dma.done %s562, 64
        $region56: #{tpu_custom_call.1} parent=51 // pred_fallthru
          _
      $region52: #{tpu_custom_call.1} parent=5 // pred_fallthru
        _
    $region6: #{tpu_custom_call.1} parent=1 // loop_footer
      %s19 = sadd.s32 1, %s15
    $region7: #{tpu_custom_call.1} parent=1 // loop_footer_branch
      %14 = sbr.rel target = $region3
    $region8: #{tpu_custom_call.1} parent=1 // loop_exit
      _
    %567 = vsyncpa [#allocation3], 1
    %s568 = scalar_lea.sflag [#allocation3], 1
    %569 = vsyncpa %s568, 1

</llo_original>
